<compile_context>
chip_gen: v7x
topology: tpu7x:2x2x1
jax: 0.10.0
libtpu: 0.0.40
codegen_flags: <defaults>
</compile_context>

<pallas_src>
import math

import jax
import jax.numpy as jnp
from jax.experimental import pallas as pl
from jax.experimental.pallas import tpu as pltpu


_LANE = 128
_MAX_BLOCK_BYTES = 2 * 1024 * 1024  # per-operand block; 3 operands x 2 buffers ~= 12 MiB VMEM
_SUBLANE_UNIT = {1: 32, 2: 16, 4: 8}  # sublane packing unit per itemsize


def _glu_kernel(a_ref, b_ref, o_ref):
    # out * sigmoid(gate); f32 math (sigmoid -> EUP, multiply -> VPU), downcast on store.
    a = a_ref[...].astype(jnp.float32)
    b = b_ref[...].astype(jnp.float32)
    o_ref[...] = (a * jax.nn.sigmoid(b)).astype(o_ref.dtype)


def _round_up(x: int, m: int) -> int:
    return ((x + m - 1) // m) * m


def _largest_tile(extent: int, unit: int, cap: int) -> int:
    """Largest multiple of `unit` dividing `extent` and <= cap (assumes extent % unit == 0)."""
    t = (min(cap, extent) // unit) * unit
    while t > unit and extent % t != 0:
        t -= unit
    return max(t, unit)


def _glu_fast(x2: jax.Array, nrows: int, ncols: int):
    """Fast path: x2 has shape (nrows, 2*ncols); halves are contiguous column ranges."""
    dtype = x2.dtype
    itemsize = dtype.itemsize
    unit = _SUBLANE_UNIT.get(itemsize, 8)
    max_elems = _MAX_BLOCK_BYTES // itemsize

    if nrows % unit == 0 and nrows >= unit:
        # Maximise lane width first (bigger contiguous DMAs), then fill rows to budget.
        tile_cols = _largest_tile(ncols, _LANE, max(_LANE, max_elems // unit))
        tile_rows = _largest_tile(nrows, unit, max(unit, max_elems // tile_cols))
    else:
        # Row count can't be sublane-tiled; take it as a full-extent block.
        tile_rows = nrows
        if nrows * _LANE > max_elems:
            return None  # would blow the block budget; let caller use the slab fallback
        tile_cols = _largest_tile(ncols, _LANE, max(_LANE, max_elems // nrows))

    # Ensure >= 2 grid steps so the "parallel" axes shard across both v7x TensorCores.
    if (nrows // tile_rows) * (ncols // tile_cols) == 1:
        if tile_rows % (2 * unit) == 0:
            tile_rows //= 2
        elif tile_cols % (2 * _LANE) == 0:
            tile_cols //= 2

    grid = (nrows // tile_rows, ncols // tile_cols)
    gate_off = ncols // tile_cols  # block offset of the gate half along the column axis

    return pl.pallas_call(
        _glu_kernel,
        out_shape=jax.ShapeDtypeStruct((nrows, ncols), dtype),
        grid_spec=pltpu.PrefetchScalarGridSpec(
            num_scalar_prefetch=0,
            grid=grid,
            in_specs=[
                pl.BlockSpec((tile_rows, tile_cols), lambda i, j: (i, j)),
                pl.BlockSpec((tile_rows, tile_cols), lambda i, j: (i, j + gate_off)),
            ],
            out_specs=pl.BlockSpec((tile_rows, tile_cols), lambda i, j: (i, j)),
        ),
        compiler_params=pltpu.CompilerParams(
            dimension_semantics=("parallel", "parallel"),
        ),
    )(x2, x2)


def _glu_slab(out_half: jax.Array, gate_half: jax.Array) -> jax.Array:
    """Fallback: flatten + zero-pad each half into a lane-dense slab, then tile over rows."""
    dtype = out_half.dtype
    half_shape = out_half.shape
    n = out_half.size
    itemsize = dtype.itemsize
    unit = _SUBLANE_UNIT.get(itemsize, 8)
    LANES = 512  # wide lanes -> fewer, larger DMAs and unmasked stores

    max_tile_rows = max(unit, ((_MAX_BLOCK_BYTES // itemsize) // LANES) // unit * unit)

    padded = _round_up(n, unit * LANES)
    rows = padded // LANES
    if rows <= max_tile_rows:
        tile_rows = rows
        # try to expose >= 2 parallel grid steps (v7x megacore) when the input allows it
        if rows % (2 * unit) == 0 and rows >= 2 * unit:
            tile_rows = rows // 2
    else:
        tile_rows = max_tile_rows
        padded = _round_up(n, tile_rows * LANES)
        rows = padded // LANES

    def to_slab(h):
        flat = h.reshape(-1)
        flat = jnp.pad(flat, (0, padded - n))
        return flat.reshape(rows, LANES)

    a = to_slab(out_half)
    b = to_slab(gate_half)

    block = pl.BlockSpec((tile_rows, LANES), lambda i: (i, 0))
    out_slab = pl.pallas_call(
        _glu_kernel,
        out_shape=jax.ShapeDtypeStruct((rows, LANES), dtype),
        grid_spec=pltpu.PrefetchScalarGridSpec(
            num_scalar_prefetch=0,
            grid=(rows // tile_rows,),
            in_specs=[block, block],
            out_specs=block,
        ),
        compiler_params=pltpu.CompilerParams(dimension_semantics=("parallel",)),
    )(a, b)

    return out_slab.reshape(-1)[:n].reshape(half_shape)


def glu(x: jax.Array, dim: int) -> jax.Array:
    """Pallas GLU matching torch: output, gate = x.chunk(2, dim); output * gate.sigmoid()."""
    dim = dim % x.ndim
    C = x.shape[dim]
    assert C % 2 == 0, f"GLU split dim must be even, got {C}"
    half_shape = tuple(s // 2 if d == dim else s for d, s in enumerate(x.shape))

    if x.size == 0:
        return jnp.zeros(half_shape, dtype=x.dtype)

    nrows = math.prod(x.shape[:dim])          # everything before `dim`
    ncols = (C // 2) * math.prod(x.shape[dim + 1:])  # half of `dim` fused with trailing dims

    if ncols % _LANE == 0:
        x2 = x.reshape(nrows, 2 * ncols)       # metadata-only (row-major contiguous)
        out2 = _glu_fast(x2, nrows, ncols)
        if out2 is not None:
            return out2.reshape(half_shape)    # metadata-only

    # Fallback: inner size not lane-aligned (or block budget exceeded) -> padded slabs.
    out_half, gate_half = jnp.split(x, 2, axis=dim)
    return _glu_slab(out_half, gate_half)


if __name__ == "__main__":
    def ref_glu(x, dim):
        o, g = jnp.split(x, 2, axis=dim)
        return o * jax.nn.sigmoid(g)

    # NCHW input, split along the channel dim (dim=1): fast path, 2 parallel grid steps.
    x1 = jax.random.normal(jax.random.PRNGKey(0), (2, 4, 16, 16), dtype=jnp.float32)
    y1 = jax.block_until_ready(glu(x1, dim=1))
    assert y1.shape == (2, 2, 16, 16), y1.shape
    assert jnp.allclose(y1, ref_glu(x1, 1), atol=1e-6, rtol=1e-6)

    # (B, T, 2D) split along the last dim: fast path with a multi-row grid.
    x2 = jax.random.normal(jax.random.PRNGKey(1), (16, 32, 256), dtype=jnp.float32)
    y2 = jax.block_until_ready(glu(x2, dim=-1))
    assert y2.shape == (16, 32, 128), y2.shape
    assert jnp.allclose(y2, ref_glu(x2, -1), atol=1e-6, rtol=1e-6)

    # Non-lane-aligned inner size exercises the padded-slab fallback path.
    x3 = jax.random.normal(jax.random.PRNGKey(2), (4, 6, 5, 5), dtype=jnp.float32)
    y3 = jax.block_until_ready(glu(x3, dim=1))
    assert y3.shape == (4, 3, 5, 5), y3.shape
    assert jnp.allclose(y3, ref_glu(x3, 1), atol=1e-6, rtol=1e-6)

    print("KERNEL_OK")
</pallas_src>

<mosaic_0001>
module attributes {stable_mosaic.version = 11 : i64} {
  func.func @_glu_kernel(%arg0: i32, %arg1: i32, %arg2: memref<2x256xf32, #tpu.memory_space<vmem>>, %arg3: memref<2x256xf32, #tpu.memory_space<vmem>>, %arg4: memref<2x256xf32, #tpu.memory_space<vmem>>) attributes {dimension_semantics = [#tpu.dimension_semantics<parallel>, #tpu.dimension_semantics<parallel>], iteration_bounds = array<i64: 1, 2>, scalar_prefetch = 0 : i64, scratch_operands = 0 : i64, tpu.core_type = #tpu.core_type<tc>, window_params = [{transform_indices = @transform_0, window_bounds = array<i64: 2, 256>}, {transform_indices = @transform_1, window_bounds = array<i64: 2, 256>}, {transform_indices = @transform_2, window_bounds = array<i64: 2, 256>}]} {
    %c0 = arith.constant 0 : index
    %c0_0 = arith.constant 0 : index
    %0 = vector.load %arg2[%c0, %c0_0] : memref<2x256xf32, #tpu.memory_space<vmem>>, vector<2x256xf32>
    %c0_1 = arith.constant 0 : index
    %c0_2 = arith.constant 0 : index
    %1 = vector.load %arg3[%c0_1, %c0_2] : memref<2x256xf32, #tpu.memory_space<vmem>>, vector<2x256xf32>
    %2 = arith.negf %1 : vector<2x256xf32>
    %3 = math.exp %2 : vector<2x256xf32>
    %cst = arith.constant 1.000000e+00 : f32
    %4 = vector.broadcast %cst : f32 to vector<2x256xf32>
    %5 = arith.addf %4, %3 : vector<2x256xf32>
    %6 = arith.divf %4, %5 : vector<2x256xf32>
    %7 = arith.mulf %0, %6 : vector<2x256xf32>
    %c0_3 = arith.constant 0 : index
    %c0_4 = arith.constant 0 : index
    %8 = vector.load %arg4[%c0_3, %c0_4] : memref<2x256xf32, #tpu.memory_space<vmem>>, vector<2x256xf32>
    tpu.vector_store %arg4[%c0_3, %c0_4], %7 {strides = array<i32>} : memref<2x256xf32, #tpu.memory_space<vmem>>, vector<2x256xf32>,
    return
  }
  func.func @transform_0(%arg0: i32, %arg1: i32) -> (i32, i32) {
    %c0_i32 = arith.constant 0 : i32
    return %arg0, %arg1 : i32, i32
  }
  func.func @transform_1(%arg0: i32, %arg1: i32) -> (i32, i32) {
    %c2_i32 = arith.constant 2 : i32
    %0 = arith.addi %arg1, %c2_i32 : i32
    %c0_i32 = arith.constant 0 : i32
    return %arg0, %0 : i32, i32
  }
  func.func @transform_2(%arg0: i32, %arg1: i32) -> (i32, i32) {
    %c0_i32 = arith.constant 0 : i32
    return %arg0, %arg1 : i32, i32
  }
}

</mosaic_0001>

<llo_original>
// kernel: tpu_custom_call.1
$region0: #{tpu_custom_call.1}
  #allocation0 [shape = 'u32[]', space=smem, size = 0x4, offset = 0x4, fixed_abs, tag = 'smem constant byte address 0x4 - core index']
  #allocation1 [shape = 'u32[144,128]{1,0:T(1,128)}', space=vmem, size = 0x12000, scoped, tag = 'internal scratch']
  %s0 = inlined_call_operand.hbm [shape: f32[2,1024], index: 0, kind: input, shape index: {}]
  %s1 = inlined_call_operand.hbm [shape: f32[2,1024], index: 1, kind: input, shape index: {}]
  %s2 = inlined_call_operand.hbm [shape: f32[2,512], index: 2, kind: output, shape index: {}]
  %s3 = sld [smem:[#allocation0]]
  $region49: #{tpu_custom_call.1} parent=0
    _
  %s5 = ssub.s32 1, %s3
  %s6 = scalar_select 0, %s5, %s3
  $region1: #{tpu_custom_call.1} parent=0
    #allocation2 [shape = 'u8[4096]{0}', space=vmem, size = 0x1000, scoped, tag = 'input window, operand 0']
    #allocation3 [shape = 's32[2]{0}', space=sflag, size = 0x8, scoped, tag = 'scoped memory for tpu_custom_call.1']
    #allocation4 [shape = 's32[2]{0}', space=sflag, size = 0x8, scoped, tag = 'scoped memory for tpu_custom_call.1']
    #allocation5 [shape = 'u8[4096]{0}', space=vmem, size = 0x1000, scoped, tag = 'input window, operand 1']
    #allocation6 [shape = 's32[2]{0}', space=sflag, size = 0x8, scoped, tag = 'scoped memory for tpu_custom_call.1']
    #allocation7 [shape = 'u8[4096]{0}', space=vmem, size = 0x1000, scoped, tag = 'output window, operand 0']
    %7 = vsyncpa [#allocation3], 0
    %s8 = scalar_lea.sflag [#allocation3], 1
    %9 = vsyncpa %s8, 0
    %10 = vsyncpa [#allocation6], 0
    %s11 = scalar_lea.sflag [#allocation6], 1
    %12 = vsyncpa %s11, 0
    %13 = vsyncpa [#allocation4], 0
    %s14 = scalar_lea.sflag [#allocation4], 1
    %15 = vsyncpa %s14, 0
    loop: start=0, step=1, limit=4
    $region2: #{tpu_custom_call.1} parent=1 // loop_pre_header
      _
    $region3: #{tpu_custom_call.1} parent=1 // loop_header
      %s17 = sphi 0, %s21
      %p18 = scmp.ge.s32.totalorder %s17, 4
      %s24 = sphi 0, %s36
      %s25 = sphi 0, %s32
      %s26 = sphi 0, %s24
      %s27 = sphi 0, %s25
      %s28 = sphi 0, %s26
      %s29 = sphi 0, %s27
      %s41 = sphi 0, %s43
      %s44 = sphi 0, %s41
      %s45 = sphi 0, %s44
      %s61 = sphi 0, %s45
      %s71 = sphi 0, %s73
      %s74 = sphi 0, %s71
      %s75 = sphi 0, %s74
      %s91 = sphi 0, %s75
      %s99 = sphi 0, %s101
      %s102 = sphi 0, %s99
      %s103 = sphi 0, %s102
      %s119 = sphi 0, %s103
    $region4: #{tpu_custom_call.1} parent=1 // loop_header_branch
      %20 = sbr.rel (%p18) target = $region8
    $region5: #{tpu_custom_call.1} parent=1 // loop_body
      %s22 = ssub.s32 %s17, 1
      %s23 = ssub.s32 %s17, 2
      %s30 = sadd.s32 1, %s25
      %p31 = scmp.ge.s32.totalorder %s30, 2
      %s32 = scalar_select %p31, 0, %s30
      %s33 = sadd.s32 1, %s24
      %s34 = scalar_select %p31, %s33, %s24
      %p35 = scmp.ge.s32.totalorder %s34, 1
      %s36 = scalar_select %p35, 0, %s34
      %s37 = ssub.s32 %s24, %s36
      %s38 = ssub.s32 %s25, %s32
      %s39 = sor.u32 %s37, %s38
      %p40 = scmp.eq.s32.totalorder %s39, 0
      %s42 = sadd.s32 %s41, 1
      %s43 = scalar_select %p40, %s41, %s42
      %p46 = pneg %p40
      %p47 = scmp.eq.s32.totalorder %s17, 1
      %p48 = por %p46, %p47
      %p49 = scmp.ne.s32.totalorder %s41, %s44
      %p50 = scmp.eq.s32.totalorder %s17, 0
      %p51 = por %p49, %p50
      %p52 = scmp.ne.s32.totalorder %s41, %s44
      %p53 = scmp.eq.s32.totalorder %s22, 1
      %p54 = por %p52, %p53
      %p55 = scmp.ne.s32.totalorder %s44, %s45
      %p56 = scmp.eq.s32.totalorder %s22, 0
      %p57 = por %p55, %p56
      %p58 = scmp.ne.s32.totalorder %s44, %s45
      %p59 = scmp.eq.s32.totalorder %s23, 1
      %p60 = por %p58, %p59
      %p62 = scmp.ne.s32.totalorder %s45, %s61
      %p63 = scmp.eq.s32.totalorder %s23, 0
      %p64 = por %p62, %p63
      %s65 = sadd.s32 %s25, 2
      %s66 = sadd.s32 %s32, 2
      %s67 = ssub.s32 %s24, %s36
      %s68 = ssub.s32 %s65, %s66
      %s69 = sor.u32 %s67, %s68
      %p70 = scmp.eq.s32.totalorder %s69, 0
      %s72 = sadd.s32 %s71, 1
      %s73 = scalar_select %p70, %s71, %s72
      %p76 = pneg %p70
      %p77 = scmp.eq.s32.totalorder %s17, 1
      %p78 = por %p76, %p77
      %p79 = scmp.ne.s32.totalorder %s71, %s74
      %p80 = scmp.eq.s32.totalorder %s17, 0
      %p81 = por %p79, %p80
      %p82 = scmp.ne.s32.totalorder %s71, %s74
      %p83 = scmp.eq.s32.totalorder %s22, 1
      %p84 = por %p82, %p83
      %p85 = scmp.ne.s32.totalorder %s74, %s75
      %p86 = scmp.eq.s32.totalorder %s22, 0
      %p87 = por %p85, %p86
      %p88 = scmp.ne.s32.totalorder %s74, %s75
      %p89 = scmp.eq.s32.totalorder %s23, 1
      %p90 = por %p88, %p89
      %p92 = scmp.ne.s32.totalorder %s75, %s91
      %p93 = scmp.eq.s32.totalorder %s23, 0
      %p94 = por %p92, %p93
      %s95 = ssub.s32 %s24, %s36
      %s96 = ssub.s32 %s25, %s32
      %s97 = sor.u32 %s95, %s96
      %p98 = scmp.eq.s32.totalorder %s97, 0
      %s100 = sadd.s32 %s99, 1
      %s101 = scalar_select %p98, %s99, %s100
      %p104 = pneg %p98
      %p105 = scmp.eq.s32.totalorder %s17, 1
      %p106 = por %p104, %p105
      %p107 = scmp.ne.s32.totalorder %s99, %s102
      %p108 = scmp.eq.s32.totalorder %s17, 0
      %p109 = por %p107, %p108
      %p110 = scmp.ne.s32.totalorder %s99, %s102
      %p111 = scmp.eq.s32.totalorder %s22, 1
      %p112 = por %p110, %p111
      %p113 = scmp.ne.s32.totalorder %s102, %s103
      %p114 = scmp.eq.s32.totalorder %s22, 0
      %p115 = por %p113, %p114
      %p116 = scmp.ne.s32.totalorder %s102, %s103
      %p117 = scmp.eq.s32.totalorder %s23, 1
      %p118 = por %p116, %p117
      %p120 = scmp.ne.s32.totalorder %s103, %s119
      %p121 = scmp.eq.s32.totalorder %s23, 0
      %p122 = por %p120, %p121
      %p123 = scmp.le.s32.totalorder 1, %s17
      %p124 = scmp.lt.s32.totalorder %s17, 3
      %p125 = pnand %p123, %p124
      %p126 = pneg %p125
      // Predicated region
      $region9: #{tpu_custom_call.1} parent=5 // pred_check
        _
      $region10: #{tpu_custom_call.1} parent=5 // pred_check_branch
        %128 = sbr.rel (%p125) target = $region12
      $region11: #{tpu_custom_call.1} parent=5 // pred_region
        %s129 = ssub.s32 %s17, 1
      $region12: #{tpu_custom_call.1} parent=5 // pred_fallthru
        _
      %p130 = scmp.lt.s32.totalorder %s17, 2
      // Predicated region
      $region13: #{tpu_custom_call.1} parent=5 // pred_check
        %p131 = pneg %p130
      $region14: #{tpu_custom_call.1} parent=5 // pred_check_branch
        %133 = sbr.rel (%p131) target = $region16
      $region15: #{tpu_custom_call.1} parent=5 // pred_region
        // Predicated region
        $region17: #{tpu_custom_call.1} parent=15 // pred_check
          %p134 = pneg %p51
        $region18: #{tpu_custom_call.1} parent=15 // pred_check_branch
          %136 = sbr.rel (%p134) target = $region20
        $region19: #{tpu_custom_call.1} parent=15 // pred_region
          %s137 = sand.u32 %s41, 1
          %s138 = scalar_lea.sflag [#allocation3], %s137
          %s139 = sand.u32 %s41, 1
          %s140 = smul.addr %s139, 4
          %s141 = scalar_lea.vmem [#allocation2], %s140
          %s142 = smul.u32 2, %s25
          %s144 = ssub.s32 64, 64
          %145 = vsyncadd %s138, %s144
          %s146 = smul.addr %s24, 8
          %s147 = sadd.s32 %s142, %s146
          %s148 = smul.addr %s147, 32
          %s149 = scalar_lea.hbm %s0, %s148
          %s151 = sshll.u32 %s141, 4
          %s152 = int_to_ptr.vmem [resolvable:$true] %s151
          %154 = dma.hbm_to_vmem [thread:$0]  %s149, 64, %s152, %s138
        $region20: #{tpu_custom_call.1} parent=15 // pred_fallthru
          _
        // Predicated region
        $region21: #{tpu_custom_call.1} parent=15 // pred_check
          %p155 = pneg %p81
        $region22: #{tpu_custom_call.1} parent=15 // pred_check_branch
          %157 = sbr.rel (%p155) target = $region24
        $region23: #{tpu_custom_call.1} parent=15 // pred_region
          %s158 = sand.u32 %s71, 1
          %s159 = scalar_lea.sflag [#allocation6], %s158
          %s160 = sand.u32 %s71, 1
          %s161 = smul.addr %s160, 4
          %s162 = scalar_lea.vmem [#allocation5], %s161
          %s163 = sadd.s32 %s25, 2
          %s164 = smul.u32 2, %s163
          %s166 = ssub.s32 64, 64
          %167 = vsyncadd %s159, %s166
          %s168 = smul.addr %s24, 8
          %s169 = sadd.s32 %s164, %s168
          %s170 = smul.addr %s169, 32
          %s171 = scalar_lea.hbm %s1, %s170
          %s173 = sshll.u32 %s162, 4
          %s174 = int_to_ptr.vmem [resolvable:$true] %s173
          %176 = dma.hbm_to_vmem [thread:$0]  %s171, 64, %s174, %s159
        $region24: #{tpu_custom_call.1} parent=15 // pred_fallthru
          _
      $region16: #{tpu_custom_call.1} parent=5 // pred_fallthru
        _
      %p177 = scmp.le.s32.totalorder 1, %s17
      %p178 = scmp.lt.s32.totalorder %s17, 3
      %p179 = pnand %p177, %p178
      %p180 = pneg %p179
      // Predicated region
      $region25: #{tpu_custom_call.1} parent=5 // pred_check
        _
      $region26: #{tpu_custom_call.1} parent=5 // pred_check_branch
        %182 = sbr.rel (%p179) target = $region28
      $region27: #{tpu_custom_call.1} parent=5 // pred_region
        %s183 = ssub.s32 %s17, 1
        %s184 = sand.u32 %s44, 1
        %s185 = scalar_lea.sflag [#allocation3], %s184
        %s186 = sand.u32 %s44, 1
        %s187 = smul.addr %s186, 4
        %s188 = scalar_lea.vmem [#allocation2], %s187
        // Predicated region
        $region29: #{tpu_custom_call.1} parent=27 // pred_check
          %p189 = pneg %p57
        $region30: #{tpu_custom_call.1} parent=27 // pred_check_branch
          %191 = sbr.rel (%p189) target = $region32
        $region31: #{tpu_custom_call.1} parent=27 // pred_region
          %192 = dma.done %s185, 64
        $region32: #{tpu_custom_call.1} parent=27 // pred_fallthru
          _
        %s193 = sand.u32 %s74, 1
        %s194 = scalar_lea.sflag [#allocation6], %s193
        %s195 = sand.u32 %s74, 1
        %s196 = smul.addr %s195, 4
        %s197 = scalar_lea.vmem [#allocation5], %s196
        // Predicated region
        $region33: #{tpu_custom_call.1} parent=27 // pred_check
          %p198 = pneg %p87
        $region34: #{tpu_custom_call.1} parent=27 // pred_check_branch
          %200 = sbr.rel (%p198) target = $region36
        $region35: #{tpu_custom_call.1} parent=27 // pred_region
          %201 = dma.done %s194, 64
        $region36: #{tpu_custom_call.1} parent=27 // pred_fallthru
          _
        %s202 = sand.u32 %s44, 1
        %s203 = scalar_lea.sflag [#allocation3], %s202
        %s204 = sand.u32 %s44, 1
        %s205 = smul.addr %s204, 4
        %s206 = scalar_lea.vmem [#allocation2], %s205
        %p207 = pneg %p57
        %p208 = pneg %p54
        %s209 = sand.u32 %s74, 1
        %s210 = scalar_lea.sflag [#allocation6], %s209
        %s211 = sand.u32 %s74, 1
        %s212 = smul.addr %s211, 4
        %s213 = scalar_lea.vmem [#allocation5], %s212
        %p214 = pneg %p87
        %p215 = pneg %p84
        %p216 = pneg %p115
        %p217 = pneg %p112
        %s218 = sand.u32 %s102, 1
        %s219 = scalar_lea.sflag [#allocation4], %s218
        %s220 = sand.u32 %s102, 1
        %s221 = smul.addr %s220, 4
        %s222 = scalar_lea.vmem [#allocation7], %s221
        %s223 = smul.u32 2, %s27
        %s224 = sadd.s32 %s27, 2
        %s225 = smul.u32 2, %s224
        %s226 = smul.u32 2, %s27
        %v227 = vld [vmem:[%s188] sm:$0xf]
        %v228 = vld [vmem:[%s197] sm:$0xf]
        %v229 = vxor.u32 %v228, 2147483648
        %v230 = vmul.f32 %v229, 1.442695
        %v231 = vpow.pop %v230
        %v232 = vadd.f32 %v231, 1.0
        %v233 = vrcp.pop %v232
        %v234 = vmul.f32 1.0, %v233
        %v235 = vmul.f32 %v227, %v234
        %236 = vst [vmem:[%s222] sm:$0xf] %v235
        %s237 = sand.u32 %s102, 1
        %s238 = scalar_lea.sflag [#allocation4], %s237
        %s239 = sand.u32 %s102, 1
        %s240 = smul.addr %s239, 4
        %s241 = scalar_lea.vmem [#allocation7], %s240
        // Predicated region
        $region37: #{tpu_custom_call.1} parent=27 // pred_check
          %p242 = pneg %p112
        $region38: #{tpu_custom_call.1} parent=27 // pred_check_branch
          %244 = sbr.rel (%p242) target = $region40
        $region39: #{tpu_custom_call.1} parent=27 // pred_region
          %s245 = smul.u32 2, %s27
          %s247 = ssub.s32 64, 64
          %248 = vsyncadd %s238, %s247
          %s249 = smul.addr %s26, 4
          %s250 = sadd.s32 %s245, %s249
          %s251 = smul.addr %s250, 32
          %s252 = scalar_lea.hbm %s2, %s251
          %s254 = sshll.u32 %s241, 4
          %s255 = int_to_ptr.vmem [resolvable:$true] %s254
          %257 = dma.vmem_to_hbm [thread:$0]  %s255, 64, %s252, %s238
        $region40: #{tpu_custom_call.1} parent=27 // pred_fallthru
          _
      $region28: #{tpu_custom_call.1} parent=5 // pred_fallthru
        _
      %p258 = scmp.le.s32.totalorder 2, %s17
      // Predicated region
      $region41: #{tpu_custom_call.1} parent=5 // pred_check
        %p259 = pneg %p258
      $region42: #{tpu_custom_call.1} parent=5 // pred_check_branch
        %261 = sbr.rel (%p259) target = $region44
      $region43: #{tpu_custom_call.1} parent=5 // pred_region
        %s262 = ssub.s32 %s17, 2
        // Predicated region
        $region45: #{tpu_custom_call.1} parent=43 // pred_check
          %p263 = pneg %p118
        $region46: #{tpu_custom_call.1} parent=43 // pred_check_branch
          %265 = sbr.rel (%p263) target = $region48
        $region47: #{tpu_custom_call.1} parent=43 // pred_region
          %s266 = sand.u32 %s103, 1
          %s267 = scalar_lea.sflag [#allocation4], %s266
          %s268 = sand.u32 %s103, 1
          %s269 = smul.addr %s268, 4
          %s270 = scalar_lea.vmem [#allocation7], %s269
          %271 = dma.done %s267, 64
        $region48: #{tpu_custom_call.1} parent=43 // pred_fallthru
          _
      $region44: #{tpu_custom_call.1} parent=5 // pred_fallthru
        _
    $region6: #{tpu_custom_call.1} parent=1 // loop_footer
      %s21 = sadd.s32 1, %s17
    $region7: #{tpu_custom_call.1} parent=1 // loop_footer_branch
      %16 = sbr.rel target = $region3
    $region8: #{tpu_custom_call.1} parent=1 // loop_exit
      _
    %272 = vsyncpa [#allocation3], 1
    %s273 = scalar_lea.sflag [#allocation3], 1
    %274 = vsyncpa %s273, 1
    %275 = vsyncpa [#allocation6], 1
    %s276 = scalar_lea.sflag [#allocation6], 1
    %277 = vsyncpa %s276, 1
    %278 = vsyncpa [#allocation4], 1
    %s279 = scalar_lea.sflag [#allocation4], 1
    %280 = vsyncpa %s279, 1

</llo_original>
